<compile_context>
chip_gen: v7x
topology: tpu7x:2x2x1
jax: 0.10.0
libtpu: 0.0.40
codegen_flags: <defaults>
</compile_context>

<pallas_src>
import jax
import jax.numpy as jnp
from jax.experimental import pallas as pl
from jax.experimental.pallas import tpu as pltpu


def _make_kernel(inv_hw):
    """inv_hw is a static Python float (1 / true H*W), closed over."""

    def kernel(x_ref, w1_ref, b1_ref, w2_ref, b2_ref, o_ref, acc_ref):
        # x_ref : (B, C, hw_tile)  -- channels on sublanes, spatial on lanes
        # w1_ref: (C, C//4)        -- Linear1 weight, (in, out) layout
        # b1_ref: (1, C//4)
        # w2_ref: (C//4, C//8)     -- Linear2 weight, (in, out) layout
        # b2_ref: (1, C//8)
        # o_ref : (B, C//8)
        # acc_ref: (B, C) f32 scratch, persists across grid steps
        k = pl.program_id(0)

        @pl.when(k == 0)
        def _():
            acc_ref[...] = jnp.zeros_like(acc_ref)

        # Partial spatial sum over the lane axis; accumulate in f32.
        x = x_ref[...]
        acc_ref[...] += jnp.sum(x.astype(jnp.float32), axis=-1)

        @pl.when(k == pl.num_programs(0) - 1)
        def _():
            # Global average pool finalize (padding columns were zero, divide
            # by the true H*W), then the two small Linear+ReLU layers on MXU.
            pooled = acc_ref[...] * inv_hw                              # (B, C)
            h1 = jnp.dot(pooled, w1_ref[...],
                         preferred_element_type=jnp.float32) + b1_ref[...]
            h1 = jnp.maximum(h1, 0.0)                                   # (B, C//4)
            h2 = jnp.dot(h1, w2_ref[...],
                         preferred_element_type=jnp.float32) + b2_ref[...]
            h2 = jnp.maximum(h2, 0.0)                                   # (B, C//8)
            o_ref[...] = h2.astype(o_ref.dtype)

    return kernel


def _choose_hw_tile(B, C, HW, itemsize, budget_bytes=8 * 1024 * 1024):
    """Largest multiple-of-128 spatial tile whose double-buffered x blocks fit
    in `budget_bytes` (safe for v5e/v6e/v7x scoped-VMEM defaults)."""
    max_tile = budget_bytes // (2 * B * C * itemsize)
    max_tile = max(128, (max_tile // 128) * 128)
    hw_pad128 = ((HW + 127) // 128) * 128
    return min(max_tile, hw_pad128)


def reduction_layer(x_nchw, w1, b1, w2, b2, *, hw_tile=None):
    """x_nchw: (B, C, H, W).
    w1: (C//4, C), b1: (C//4,), w2: (C//8, C//4), b2: (C//8,)  (PyTorch layout).
    """
    B, C, H, W = x_nchw.shape
    HW = H * W

    # Free reshape (contiguous), no transpose / no extra HBM copy of x.
    x = x_nchw.reshape(B, C, HW)
    itemsize = jnp.dtype(x.dtype).itemsize

    if hw_tile is None:
        hw_tile = _choose_hw_tile(B, C, HW, itemsize)
    num_tiles = pl.cdiv(HW, hw_tile)
    hw_pad = num_tiles * hw_tile
    if hw_pad != HW:
        # Zero-pad the spatial axis; epilogue divides by the true HW.
        x = jnp.pad(x, ((0, 0), (0, 0), (0, hw_pad - HW)))

    # Weights in (in, out) layout so the kernel computes pooled @ W + b.
    w1_t = jnp.transpose(w1)                    # (C, C//4)
    w2_t = jnp.transpose(w2)                    # (C//4, C//8)
    b1_2d = b1.reshape(1, -1)
    b2_2d = b2.reshape(1, -1)
    hid_dim = w1.shape[0]                       # C // 4
    out_dim = w2.shape[0]                       # C // 8

    # Explicit VMEM limit: double-buffered x blocks + resident weights/biases
    # + accumulator + output, with 2x headroom, capped below v7x physical.
    w_bytes = (C * hid_dim + hid_dim * out_dim + hid_dim + out_dim) * 4
    used = 2 * B * C * hw_tile * itemsize + 2 * w_bytes + B * C * 4 + 2 * B * out_dim * 4
    vmem_limit = int(min(max(2 * used, 16 * 1024 * 1024), 60 * 1024 * 1024))

    grid_spec = pltpu.PrefetchScalarGridSpec(
        num_scalar_prefetch=0,
        grid=(num_tiles,),
        in_specs=[
            pl.BlockSpec((B, C, hw_tile), lambda k: (0, 0, k)),   # streamed x
            pl.BlockSpec((C, hid_dim), lambda k: (0, 0)),         # resident w1
            pl.BlockSpec((1, hid_dim), lambda k: (0, 0)),         # resident b1
            pl.BlockSpec((hid_dim, out_dim), lambda k: (0, 0)),   # resident w2
            pl.BlockSpec((1, out_dim), lambda k: (0, 0)),         # resident b2
        ],
        out_specs=pl.BlockSpec((B, out_dim), lambda k: (0, 0)),
        scratch_shapes=[pltpu.VMEM((B, C), jnp.float32)],
    )

    # NOTE: on v7x a second "parallel" grid axis could split the spatial range
    # across the two TensorCores; omitted here to keep a single accumulator.
    return pl.pallas_call(
        _make_kernel(1.0 / HW),
        out_shape=jax.ShapeDtypeStruct((B, out_dim), jnp.float32),
        grid_spec=grid_spec,
        compiler_params=pltpu.CompilerParams(
            dimension_semantics=("arbitrary",),
            vmem_limit_bytes=vmem_limit,
        ),
    )(x, w1_t, b1_2d, w2_t, b2_2d)


def _reference(x_nchw, w1, b1, w2, b2):
    pooled = jnp.mean(x_nchw.astype(jnp.float32), axis=(2, 3))     # (B, C)
    h1 = jnp.maximum(pooled @ w1.T + b1, 0.0)
    h2 = jnp.maximum(h1 @ w2.T + b2, 0.0)
    return h2


if __name__ == "__main__":
    key = jax.random.PRNGKey(0)
    B, C, H, W = 2, 32, 16, 16        # inplanes = 32 -> hidden 8 -> out 4
    k_x, k_w1, k_b1, k_w2, k_b2 = jax.random.split(key, 5)

    x = jax.random.normal(k_x, (B, C, H, W), dtype=jnp.float32)

    # Deterministic init mimicking nn.Linear default (uniform +-1/sqrt(fan_in)).
    lim1 = 1.0 / jnp.sqrt(jnp.float32(C))
    w1 = jax.random.uniform(k_w1, (C // 4, C), jnp.float32, -lim1, lim1)
    b1 = jax.random.uniform(k_b1, (C // 4,), jnp.float32, -lim1, lim1)
    lim2 = 1.0 / jnp.sqrt(jnp.float32(C // 4))
    w2 = jax.random.uniform(k_w2, (C // 8, C // 4), jnp.float32, -lim2, lim2)
    b2 = jax.random.uniform(k_b2, (C // 8,), jnp.float32, -lim2, lim2)

    # 1) Single-tile path (HW = 256 fits one block).
    out = jax.block_until_ready(reduction_layer(x, w1, b1, w2, b2))
    ref = _reference(x, w1, b1, w2, b2)
    assert out.shape == (B, C // 8)
    assert jnp.allclose(out, ref, atol=1e-5, rtol=1e-5)

    # 2) Multi-tile path with spatial padding (forces hw_tile=128, grid=2,
    #    exercises accumulate + zero-pad + epilogue divide-by-true-HW).
    out_tiled = jax.block_until_ready(
        reduction_layer(x, w1, b1, w2, b2, hw_tile=128))
    assert jnp.allclose(out_tiled, ref, atol=1e-5, rtol=1e-5)

    print("KERNEL_OK")
</pallas_src>

<mosaic_0001>
module attributes {stable_mosaic.version = 11 : i64} {
  func.func @kernel(%arg0: i32, %arg1: memref<2x32x256xf32, #tpu.memory_space<vmem>>, %arg2: memref<32x8xf32, #tpu.memory_space<vmem>>, %arg3: memref<1x8xf32, #tpu.memory_space<vmem>>, %arg4: memref<8x4xf32, #tpu.memory_space<vmem>>, %arg5: memref<1x4xf32, #tpu.memory_space<vmem>>, %arg6: memref<2x4xf32, #tpu.memory_space<vmem>>, %arg7: memref<2x32xf32, #tpu.memory_space<vmem>>) attributes {dimension_semantics = [#tpu.dimension_semantics<arbitrary>], iteration_bounds = array<i64: 1>, scalar_prefetch = 0 : i64, scratch_operands = 1 : i64, tpu.core_type = #tpu.core_type<tc>, window_params = [{transform_indices = @transform_0, window_bounds = array<i64: 2, 32, 256>}, {pipeline_mode = #tpu.pipeline_mode<synchronous>, transform_indices = @transform_1, window_bounds = array<i64: 32, 8>}, {pipeline_mode = #tpu.pipeline_mode<synchronous>, transform_indices = @transform_2, window_bounds = array<i64: 1, 8>}, {pipeline_mode = #tpu.pipeline_mode<synchronous>, transform_indices = @transform_3, window_bounds = array<i64: 8, 4>}, {pipeline_mode = #tpu.pipeline_mode<synchronous>, transform_indices = @transform_4, window_bounds = array<i64: 1, 4>}, {pipeline_mode = #tpu.pipeline_mode<synchronous>, transform_indices = @transform_5, window_bounds = array<i64: 2, 4>}]} {
    %c0_i32 = arith.constant 0 : i32
    %0 = arith.cmpi eq, %arg0, %c0_i32 : i32
    %1 = arith.extui %0 : i1 to i32
    %c0_i32_0 = arith.constant 0 : i32
    %2 = arith.cmpi ne, %1, %c0_i32_0 : i32
    scf.if %2 {
      %cst_9 = arith.constant 0.000000e+00 : f32
      %11 = vector.broadcast %cst_9 : f32 to vector<2x32xf32>
      %c0_10 = arith.constant 0 : index
      %c0_11 = arith.constant 0 : index
      %12 = vector.load %arg7[%c0_10, %c0_11] : memref<2x32xf32, #tpu.memory_space<vmem>>, vector<2x32xf32>
      tpu.vector_store %arg7[%c0_10, %c0_11], %11 {strides = array<i32>} : memref<2x32xf32, #tpu.memory_space<vmem>>, vector<2x32xf32>,
    } else {
    }
    %c0 = arith.constant 0 : index
    %c0_1 = arith.constant 0 : index
    %c0_2 = arith.constant 0 : index
    %3 = vector.load %arg1[%c0, %c0_1, %c0_2] : memref<2x32x256xf32, #tpu.memory_space<vmem>>, vector<2x32x256xf32>
    %c0_3 = arith.constant 0 : index
    %c0_4 = arith.constant 0 : index
    %4 = vector.load %arg7[%c0_3, %c0_4] : memref<2x32xf32, #tpu.memory_space<vmem>>, vector<2x32xf32>
    %cst = arith.constant dense<0.000000e+00> : vector<2x32xf32>
    %5 = vector.multi_reduction <add>, %3, %cst [2] : vector<2x32x256xf32> to vector<2x32xf32>
    %6 = arith.addf %4, %5 : vector<2x32xf32>
    %c0_5 = arith.constant 0 : index
    %c0_6 = arith.constant 0 : index
    %7 = vector.load %arg7[%c0_5, %c0_6] : memref<2x32xf32, #tpu.memory_space<vmem>>, vector<2x32xf32>
    tpu.vector_store %arg7[%c0_5, %c0_6], %6 {strides = array<i32>} : memref<2x32xf32, #tpu.memory_space<vmem>>, vector<2x32xf32>,
    %c0_i32_7 = arith.constant 0 : i32
    %8 = arith.cmpi eq, %arg0, %c0_i32_7 : i32
    %9 = arith.extui %8 : i1 to i32
    %c0_i32_8 = arith.constant 0 : i32
    %10 = arith.cmpi ne, %9, %c0_i32_8 : i32
    scf.if %10 {
      %c0_9 = arith.constant 0 : index
      %c0_10 = arith.constant 0 : index
      %11 = vector.load %arg7[%c0_9, %c0_10] : memref<2x32xf32, #tpu.memory_space<vmem>>, vector<2x32xf32>
      %cst_11 = arith.constant 3.906250e-03 : f32
      %12 = vector.broadcast %cst_11 : f32 to vector<2x32xf32>
      %13 = arith.mulf %11, %12 : vector<2x32xf32>
      %c0_12 = arith.constant 0 : index
      %c0_13 = arith.constant 0 : index
      %14 = vector.load %arg2[%c0_12, %c0_13] : memref<32x8xf32, #tpu.memory_space<vmem>>, vector<32x8xf32>
      %cst_14 = arith.constant dense<0.000000e+00> : vector<2x8xf32>
      %15 = tpu.matmul %13, %14, %cst_14 {dimension_numbers = #tpu.dot_dimension_numbers<[1], [0], [0], [1], [0, 0, 1, 1], [], []>} : vector<2x32xf32>, vector<32x8xf32>, vector<2x8xf32> -> vector<2x8xf32>
      %c0_15 = arith.constant 0 : index
      %c0_16 = arith.constant 0 : index
      %16 = vector.load %arg3[%c0_15, %c0_16] : memref<1x8xf32, #tpu.memory_space<vmem>>, vector<1x8xf32>
      %17 = vector.broadcast %16 : vector<1x8xf32> to vector<2x8xf32>
      %18 = arith.addf %15, %17 : vector<2x8xf32>
      %cst_17 = arith.constant 0.000000e+00 : f32
      %19 = vector.broadcast %cst_17 : f32 to vector<2x8xf32>
      %20 = arith.maximumf %18, %19 : vector<2x8xf32>
      %c0_18 = arith.constant 0 : index
      %c0_19 = arith.constant 0 : index
      %21 = vector.load %arg4[%c0_18, %c0_19] : memref<8x4xf32, #tpu.memory_space<vmem>>, vector<8x4xf32>
      %cst_20 = arith.constant dense<0.000000e+00> : vector<2x4xf32>
      %22 = tpu.matmul %20, %21, %cst_20 {dimension_numbers = #tpu.dot_dimension_numbers<[1], [0], [0], [1], [0, 0, 1, 1], [], []>} : vector<2x8xf32>, vector<8x4xf32>, vector<2x4xf32> -> vector<2x4xf32>
      %c0_21 = arith.constant 0 : index
      %c0_22 = arith.constant 0 : index
      %23 = vector.load %arg5[%c0_21, %c0_22] : memref<1x4xf32, #tpu.memory_space<vmem>>, vector<1x4xf32>
      %24 = vector.broadcast %23 : vector<1x4xf32> to vector<2x4xf32>
      %25 = arith.addf %22, %24 : vector<2x4xf32>
      %cst_23 = arith.constant 0.000000e+00 : f32
      %26 = vector.broadcast %cst_23 : f32 to vector<2x4xf32>
      %27 = arith.maximumf %25, %26 : vector<2x4xf32>
      %c0_24 = arith.constant 0 : index
      %c0_25 = arith.constant 0 : index
      %28 = vector.load %arg6[%c0_24, %c0_25] : memref<2x4xf32, #tpu.memory_space<vmem>>, vector<2x4xf32>
      tpu.vector_store %arg6[%c0_24, %c0_25], %27 {strides = array<i32>} : memref<2x4xf32, #tpu.memory_space<vmem>>, vector<2x4xf32>,
    } else {
    }
    return
  }
  func.func @transform_0(%arg0: i32) -> (i32, i32, i32) {
    %c0_i32 = arith.constant 0 : i32
    %c0_i32_0 = arith.constant 0 : i32
    %c0_i32_1 = arith.constant 0 : i32
    return %c0_i32, %c0_i32_0, %arg0 : i32, i32, i32
  }
  func.func @transform_1(%arg0: i32) -> (i32, i32) {
    %c0_i32 = arith.constant 0 : i32
    %c0_i32_0 = arith.constant 0 : i32
    %c0_i32_1 = arith.constant 0 : i32
    return %c0_i32, %c0_i32_0 : i32, i32
  }
  func.func @transform_2(%arg0: i32) -> (i32, i32) {
    %c0_i32 = arith.constant 0 : i32
    %c0_i32_0 = arith.constant 0 : i32
    %c0_i32_1 = arith.constant 0 : i32
    return %c0_i32, %c0_i32_0 : i32, i32
  }
  func.func @transform_3(%arg0: i32) -> (i32, i32) {
    %c0_i32 = arith.constant 0 : i32
    %c0_i32_0 = arith.constant 0 : i32
    %c0_i32_1 = arith.constant 0 : i32
    return %c0_i32, %c0_i32_0 : i32, i32
  }
  func.func @transform_4(%arg0: i32) -> (i32, i32) {
    %c0_i32 = arith.constant 0 : i32
    %c0_i32_0 = arith.constant 0 : i32
    %c0_i32_1 = arith.constant 0 : i32
    return %c0_i32, %c0_i32_0 : i32, i32
  }
  func.func @transform_5(%arg0: i32) -> (i32, i32) {
    %c0_i32 = arith.constant 0 : i32
    %c0_i32_0 = arith.constant 0 : i32
    %c0_i32_1 = arith.constant 0 : i32
    return %c0_i32, %c0_i32_0 : i32, i32
  }
}

</mosaic_0001>

<llo_original>
// kernel: tpu_custom_call.1
$region0: #{tpu_custom_call.1}
  #allocation0 [shape = 'u32[]', space=smem, size = 0x4, offset = 0x4, fixed_abs, tag = 'smem constant byte address 0x4 - core index']
  #allocation1 [shape = 'u32[144,128]{1,0:T(1,128)}', space=vmem, size = 0x12000, scoped, tag = 'internal scratch']
  #allocation2 [shape = 'f32[2,32]{1,0:T(2,128)}', space=vmem, size = 0x400, scoped, tag = 'scratch operand']
  %s0 = inlined_call_operand.hbm [shape: f32[2,32,256], index: 0, kind: input, shape index: {}]
  %s1 = inlined_call_operand.vmem [shape: f32[32,8], index: 1, kind: input, shape index: {}]
  %s2 = inlined_call_operand.vmem [shape: f32[1,8], index: 2, kind: input, shape index: {}]
  %s3 = inlined_call_operand.vmem [shape: f32[8,4], index: 3, kind: input, shape index: {}]
  %s4 = inlined_call_operand.vmem [shape: f32[1,4], index: 4, kind: input, shape index: {}]
  %s5 = inlined_call_operand.hbm [shape: f32[2,4], index: 5, kind: output, shape index: {}]
  %s6 = sld [smem:[#allocation0]]
  $region42: #{tpu_custom_call.1} parent=0
    _
  %s8 = ssub.s32 1, %s6
  %s9 = scalar_select 0, %s8, %s6
  $region1: #{tpu_custom_call.1} parent=0
    #allocation3 [shape = 'u8[65536]{0}', space=vmem, size = 0x10000, scoped, tag = 'input window, operand 0, single buffered']
    #allocation4 [shape = 's32[1]{0}', space=sflag, size = 0x4, scoped, tag = 'scoped memory for tpu_custom_call.1']
    #allocation5 [shape = 's32[1]{0}', space=sflag, size = 0x4, scoped, tag = 'scoped memory for tpu_custom_call.1']
    #allocation6 [shape = 'u8[1024]{0}', space=vmem, size = 0x400, scoped, tag = 'output window, operand 0, single buffered']
    %10 = vsyncpa [#allocation4], 0
    %11 = vsyncpa [#allocation5], 0
    // Predicated region
    $region2: #{tpu_custom_call.1} parent=1 // pred_check
      _
    $region3: #{tpu_custom_call.1} parent=1 // pred_check_branch
      %13 = sbr.rel (0) target = $region5
    $region4: #{tpu_custom_call.1} parent=1 // pred_region
      %s15 = ssub.s32 2048, 2048
      %16 = vsyncadd [#allocation4], %s15
      %s17 = sshll.u32 [#allocation3], 4
      %s18 = int_to_ptr.vmem [resolvable:$true] %s17
      %23 = dma.hbm_to_vmem [thread:$0]  %s0, 2048, %s18, [#allocation4], 256, 256, 16
    $region5: #{tpu_custom_call.1} parent=1 // pred_fallthru
      _
    // Predicated region
    $region6: #{tpu_custom_call.1} parent=1 // pred_check
      _
    $region7: #{tpu_custom_call.1} parent=1 // pred_check_branch
      %25 = sbr.rel (0) target = $region9
    $region8: #{tpu_custom_call.1} parent=1 // pred_region
      _
    $region9: #{tpu_custom_call.1} parent=1 // pred_fallthru
      _
    // Predicated region
    $region10: #{tpu_custom_call.1} parent=1 // pred_check
      _
    $region11: #{tpu_custom_call.1} parent=1 // pred_check_branch
      %27 = sbr.rel (0) target = $region13
    $region12: #{tpu_custom_call.1} parent=1 // pred_region
      _
    $region13: #{tpu_custom_call.1} parent=1 // pred_fallthru
      _
    // Predicated region
    $region14: #{tpu_custom_call.1} parent=1 // pred_check
      _
    $region15: #{tpu_custom_call.1} parent=1 // pred_check_branch
      %29 = sbr.rel (0) target = $region17
    $region16: #{tpu_custom_call.1} parent=1 // pred_region
      _
    $region17: #{tpu_custom_call.1} parent=1 // pred_fallthru
      _
    // Predicated region
    $region18: #{tpu_custom_call.1} parent=1 // pred_check
      _
    $region19: #{tpu_custom_call.1} parent=1 // pred_check_branch
      %31 = sbr.rel (0) target = $region21
    $region20: #{tpu_custom_call.1} parent=1 // pred_region
      _
    $region21: #{tpu_custom_call.1} parent=1 // pred_fallthru
      _
    // Predicated region
    $region22: #{tpu_custom_call.1} parent=1 // pred_check
      _
    $region23: #{tpu_custom_call.1} parent=1 // pred_check_branch
      %33 = sbr.rel (0) target = $region25
    $region24: #{tpu_custom_call.1} parent=1 // pred_region
      %34 = dma.done [#allocation4], 2048
    $region25: #{tpu_custom_call.1} parent=1 // pred_fallthru
      _
    %p35 = scmp.eq.s32.totalorder 0, 0
    // Predicated region
    $region26: #{tpu_custom_call.1} parent=1 // pred_check
      %p36 = pneg %p35
    $region27: #{tpu_custom_call.1} parent=1 // pred_check_branch
      %38 = sbr.rel (%p36) target = $region29
    $region28: #{tpu_custom_call.1} parent=1 // pred_region
      %vm39 = vcmask 254976
      %40 = vst.msk [vmem:[#allocation2] sm:$0x3] %vm39, 0.0
    $region29: #{tpu_custom_call.1} parent=1 // pred_fallthru
      _
    %v41 = vld [vmem:[#allocation3] sm:$0xff]
    %v42 = vld [vmem:[#allocation3 + $0x8] sm:$0xff]
    %v43 = vld [vmem:[#allocation3 + $0x10] sm:$0xff]
    %v44 = vld [vmem:[#allocation3 + $0x18] sm:$0xff]
    %v45 = vld [vmem:[#allocation3 + $0x20] sm:$0xff]
    %v46 = vld [vmem:[#allocation3 + $0x28] sm:$0xff]
    %v47 = vld [vmem:[#allocation3 + $0x30] sm:$0xff]
    %v48 = vld [vmem:[#allocation3 + $0x38] sm:$0xff]
    %v49 = vld [vmem:[#allocation3 + $0x40] sm:$0xff]
    %v50 = vld [vmem:[#allocation3 + $0x48] sm:$0xff]
    %v51 = vld [vmem:[#allocation3 + $0x50] sm:$0xff]
    %v52 = vld [vmem:[#allocation3 + $0x58] sm:$0xff]
    %v53 = vld [vmem:[#allocation3 + $0x60] sm:$0xff]
    %v54 = vld [vmem:[#allocation3 + $0x68] sm:$0xff]
    %v55 = vld [vmem:[#allocation3 + $0x70] sm:$0xff]
    %v56 = vld [vmem:[#allocation3 + $0x78] sm:$0xff]
    %v57 = vld [vmem:[#allocation2] sm:$0x3]
    %v58 = vadd.f32 %v41, %v42
    %59 = vadd.xlane.f32.xlu0 %v58
    %v60 = vpop.xlane.xlu0 %59
    %v61 = vadd.f32 %v43, %v44
    %62 = vadd.xlane.f32.xlu0 %v61
    %v63 = vpop.xlane.xlu0 %62
    %v64 = vadd.f32 %v45, %v46
    %65 = vadd.xlane.f32.xlu0 %v64
    %v66 = vpop.xlane.xlu0 %65
    %v67 = vadd.f32 %v47, %v48
    %68 = vadd.xlane.f32.xlu0 %v67
    %v69 = vpop.xlane.xlu0 %68
    %v70 = vadd.f32 %v49, %v50
    %71 = vadd.xlane.f32.xlu0 %v70
    %v72 = vpop.xlane.xlu0 %71
    %v73 = vadd.f32 %v51, %v52
    %74 = vadd.xlane.f32.xlu0 %v73
    %v75 = vpop.xlane.xlu0 %74
    %v76 = vadd.f32 %v53, %v54
    %77 = vadd.xlane.f32.xlu0 %v76
    %v78 = vpop.xlane.xlu0 %77
    %v79 = vadd.f32 %v55, %v56
    %80 = vadd.xlane.f32.xlu0 %v79
    %v81 = vpop.xlane.xlu0 %80
    %v90 = vlaneseq
    %v91 = vand.u32 %v90, 127
    %v92 = vlaneseq
    %v93 = vshrl.u32 %v92, 7
    %v94 = vsub.s32 %v91, %v93
    %v95 = vrot.slane %v60, %v94
    %v96 = vadd.s32 %v91, 4294967288
    %v97 = vlaneseq
    %v98 = vshrl.u32 %v97, 7
    %v99 = vsub.s32 %v96, %v98
    %v100 = vrot.slane %v63, %v99
    %vm101 = vcmask 130112
    %v102 = vsel %vm101, %v100, %v95
    %v103 = vadd.s32 %v91, 4294967280
    %v104 = vlaneseq
    %v105 = vshrl.u32 %v104, 7
    %v106 = vsub.s32 %v103, %v105
    %v107 = vrot.slane %v66, %v106
    %vm108 = vcmask 195712
    %v109 = vsel %vm108, %v107, %v102
    %v110 = vadd.s32 %v91, 4294967272
    %v111 = vlaneseq
    %v112 = vshrl.u32 %v111, 7
    %v113 = vsub.s32 %v110, %v112
    %v114 = vrot.slane %v69, %v113
    %vm115 = vcmask 261312
    %v116 = vsel %vm115, %v114, %v109
    %v117 = vlaneseq
    %v118 = vshrl.u32 %v117, 7
    %v119 = vsub.s32 %v91, %v118
    %v120 = vrot.slane %v72, %v119
    %v121 = vlaneseq
    %v122 = vshrl.u32 %v121, 7
    %v123 = vsub.s32 %v96, %v122
    %v124 = vrot.slane %v75, %v123
    %v125 = vsel %vm101, %v124, %v120
    %v126 = vlaneseq
    %v127 = vshrl.u32 %v126, 7
    %v128 = vsub.s32 %v103, %v127
    %v129 = vrot.slane %v78, %v128
    %v130 = vsel %vm108, %v129, %v125
    %v131 = vlaneseq
    %v132 = vshrl.u32 %v131, 7
    %v133 = vsub.s32 %v110, %v132
    %v134 = vrot.slane %v81, %v133
    %v135 = vsel %vm115, %v134, %v130
    %vm136 = vcmask 1041409
    %v137 = vsel %vm136, %v135, %v116
    %v139 = vadd.f32 %v57, %v137
    %vm140 = vcmask 254976
    %141 = vst.msk [vmem:[#allocation2] sm:$0x3] %vm140, %v139
    // Predicated region
    $region30: #{tpu_custom_call.1} parent=1 // pred_check
      %p142 = pneg %p35
    $region31: #{tpu_custom_call.1} parent=1 // pred_check_branch
      %144 = sbr.rel (%p142) target = $region33
    $region32: #{tpu_custom_call.1} parent=1 // pred_region
      %v145 = vld [vmem:[#allocation2] sm:$0x3]
      %v146 = vmul.f32 %v145, 0.00390625
      %v147 = vld [vmem:[%s1] sm:$0xff]
      %v148 = vld [vmem:[%s1 + $0x8] sm:$0xff]
      %v149 = vld [vmem:[%s1 + $0x10] sm:$0xff]
      %v150 = vld [vmem:[%s1 + $0x18] sm:$0xff]
      %v151 = vld [vmem:[%s2] sm:$0x1]
      %v153 = vlaneseq
      %v154 = vshrl.u32 %v153, 7
      %v155 = vsub.s32 0, %v154
      %v156 = vrot.slane %v151, %v155
      %vm158 = vcmask 261120
      %v160 = vsel %vm158, %v146, 0
      %162 = vmatprep.subr.mxu0 0.0
      %163 = vmatpush1.msra.mxu0 %v147
      %164 = vmatprep.subr.mxu0 0.0
      %165 = vmatpush1.msra.mxu0 %v148
      %166 = vmatprep.subr.mxu0 0.0
      %167 = vmatpush1.msra.mxu0 %v149
      %168 = vmatprep.subr.mxu0 0.0
      %169 = vmatpush1.msra.mxu0 %v150
      %170 = vmatprep.subr.mxu0 0.0
      %171 = vmatpush1.msra.mxu0 0.0
      %172 = vmatprep.subr.mxu0 0.0
      %173 = vmatpush1.msra.mxu0 0.0
      %174 = vmatprep.subr.mxu0 0.0
      %175 = vmatpush1.msra.mxu0 0.0
      %176 = vmatprep.subr.mxu0 0.0
      %177 = vmatpush1.msra.mxu0 0.0
      %178 = vmatprep.subr.mxu0 0.0
      %179 = vmatpush1.msra.mxu0 0.0
      %180 = vmatprep.subr.mxu0 0.0
      %181 = vmatpush1.msra.mxu0 0.0
      %182 = vmatprep.subr.mxu0 0.0
      %183 = vmatpush1.msra.mxu0 0.0
      %184 = vmatprep.subr.mxu0 0.0
      %185 = vmatpush1.msra.mxu0 0.0
      %186 = vmatprep.subr.mxu0 0.0
      %187 = vmatpush1.msra.mxu0 0.0
      %188 = vmatprep.subr.mxu0 0.0
      %189 = vmatpush1.msra.mxu0 0.0
      %190 = vmatprep.subr.mxu0 0.0
      %191 = vmatpush1.msra.mxu0 0.0
      %192 = vmatprep.subr.mxu0 0.0
      %193 = vmatpush1.msra.mxu0 0.0
      %194 = vmatprep.subr.mxu0 0.0
      %195 = vmatpush1.msra.mxu0 0.0
      %196 = vmatprep.subr.mxu0 0.0
      %197 = vmatpush1.msra.mxu0 0.0
      %198 = vmatprep.subr.mxu0 0.0
      %199 = vmatpush1.msra.mxu0 0.0
      %200 = vmatprep.subr.mxu0 0.0
      %201 = vmatpush1.msra.mxu0 0.0
      %202 = vmatprep.subr.mxu0 0.0
      %203 = vmatpush1.msra.mxu0 0.0
      %204 = vmatprep.subr.mxu0 0.0
      %205 = vmatpush1.msra.mxu0 0.0
      %206 = vmatprep.subr.mxu0 0.0
      %207 = vmatpush1.msra.mxu0 0.0
      %208 = vmatprep.subr.mxu0 0.0
      %209 = vmatpush1.msra.mxu0 0.0
      %210 = vmatprep.subr.mxu0 0.0
      %211 = vmatpush1.msra.mxu0 0.0
      %212 = vmatprep.subr.mxu0 0.0
      %213 = vmatpush1.msra.mxu0 0.0
      %214 = vmatprep.subr.mxu0 0.0
      %215 = vmatpush1.msra.mxu0 0.0
      %216 = vmatprep.subr.mxu0 0.0
      %217 = vmatpush1.msra.mxu0 0.0
      %218 = vmatprep.subr.mxu0 0.0
      %219 = vmatpush1.msra.mxu0 0.0
      %220 = vmatprep.subr.mxu0 0.0
      %221 = vmatpush1.msra.mxu0 0.0
      %222 = vmatprep.subr.mxu0 0.0
      %223 = vmatpush1.msra.mxu0 0.0
      %224 = vmatprep.subr.mxu0 0.0
      %225 = vmatpush1.msra.mxu0 0.0
      %226 = vmatprep.mubr.f32.mxu0 0.0
      %227 = vmatmul.mubr.f32.gmra.mrb[0].mxu0 %v160
      %v228 = vpop.f32.mrb[0].mxu0
      %v229 = vadd.f32 %v156, %v228
      %v230 = vpop.f32.mrb[0].mxu0
      %231 = vdwg.mxu0
      %v232 = vmax.f32 %v229, 0.0
      %v233 = vld [vmem:[%s3] sm:$0xff]
      %v234 = vld [vmem:[%s4] sm:$0x1]
      %v236 = vlaneseq
      %v237 = vshrl.u32 %v236, 7
      %v238 = vsub.s32 0, %v237
      %v239 = vrot.slane %v234, %v238
      %vm241 = vcmask 64512
      %v243 = vsel %vm241, %v232, 0
      %245 = vmatprep.subr.mxu0 0.0
      %246 = vmatpush1.msra.mxu0 %v233
      %247 = vmatprep.subr.mxu0 0.0
      %248 = vmatpush1.msra.mxu0 0.0
      %249 = vmatprep.subr.mxu0 0.0
      %250 = vmatpush1.msra.mxu0 0.0
      %251 = vmatprep.subr.mxu0 0.0
      %252 = vmatpush1.msra.mxu0 0.0
      %253 = vmatprep.subr.mxu0 0.0
      %254 = vmatpush1.msra.mxu0 0.0
      %255 = vmatprep.subr.mxu0 0.0
      %256 = vmatpush1.msra.mxu0 0.0
      %257 = vmatprep.subr.mxu0 0.0
      %258 = vmatpush1.msra.mxu0 0.0
      %259 = vmatprep.subr.mxu0 0.0
      %260 = vmatpush1.msra.mxu0 0.0
      %261 = vmatprep.subr.mxu0 0.0
      %262 = vmatpush1.msra.mxu0 0.0
      %263 = vmatprep.subr.mxu0 0.0
      %264 = vmatpush1.msra.mxu0 0.0
      %265 = vmatprep.subr.mxu0 0.0
      %266 = vmatpush1.msra.mxu0 0.0
      %267 = vmatprep.subr.mxu0 0.0
      %268 = vmatpush1.msra.mxu0 0.0
      %269 = vmatprep.subr.mxu0 0.0
      %270 = vmatpush1.msra.mxu0 0.0
      %271 = vmatprep.subr.mxu0 0.0
      %272 = vmatpush1.msra.mxu0 0.0
      %273 = vmatprep.subr.mxu0 0.0
      %274 = vmatpush1.msra.mxu0 0.0
      %275 = vmatprep.subr.mxu0 0.0
      %276 = vmatpush1.msra.mxu0 0.0
      %277 = vmatprep.subr.mxu0 0.0
      %278 = vmatpush1.msra.mxu0 0.0
      %279 = vmatprep.subr.mxu0 0.0
      %280 = vmatpush1.msra.mxu0 0.0
      %281 = vmatprep.subr.mxu0 0.0
      %282 = vmatpush1.msra.mxu0 0.0
      %283 = vmatprep.subr.mxu0 0.0
      %284 = vmatpush1.msra.mxu0 0.0
      %285 = vmatprep.subr.mxu0 0.0
      %286 = vmatpush1.msra.mxu0 0.0
      %287 = vmatprep.subr.mxu0 0.0
      %288 = vmatpush1.msra.mxu0 0.0
      %289 = vmatprep.subr.mxu0 0.0
      %290 = vmatpush1.msra.mxu0 0.0
      %291 = vmatprep.subr.mxu0 0.0
      %292 = vmatpush1.msra.mxu0 0.0
      %293 = vmatprep.subr.mxu0 0.0
      %294 = vmatpush1.msra.mxu0 0.0
      %295 = vmatprep.subr.mxu0 0.0
      %296 = vmatpush1.msra.mxu0 0.0
      %297 = vmatprep.subr.mxu0 0.0
      %298 = vmatpush1.msra.mxu0 0.0
      %299 = vmatprep.subr.mxu0 0.0
      %300 = vmatpush1.msra.mxu0 0.0
      %301 = vmatprep.subr.mxu0 0.0
      %302 = vmatpush1.msra.mxu0 0.0
      %303 = vmatprep.subr.mxu0 0.0
      %304 = vmatpush1.msra.mxu0 0.0
      %305 = vmatprep.subr.mxu0 0.0
      %306 = vmatpush1.msra.mxu0 0.0
      %307 = vmatprep.subr.mxu0 0.0
      %308 = vmatpush1.msra.mxu0 0.0
      %309 = vmatprep.mubr.f32.mxu0 0.0
      %310 = vmatmul.mubr.f32.gmra.mrb[0].mxu0 %v243
      %v311 = vpop.f32.mrb[0].mxu0
      %v312 = vadd.f32 %v239, %v311
      %v313 = vpop.f32.mrb[0].mxu0
      %314 = vdwg.mxu0
      %v315 = vmax.f32 %v312, 0.0
      %vm316 = vcmask 25600
      %317 = vst.msk [vmem:[#allocation6] sm:$0x3] %vm316, %v315
    $region33: #{tpu_custom_call.1} parent=1 // pred_fallthru
      _
    // Predicated region
    $region34: #{tpu_custom_call.1} parent=1 // pred_check
      _
    $region35: #{tpu_custom_call.1} parent=1 // pred_check_branch
      %319 = sbr.rel (0) target = $region37
    $region36: #{tpu_custom_call.1} parent=1 // pred_region
      %s321 = ssub.s32 32, 32
      %322 = vsyncadd [#allocation5], %s321
      %s324 = sshll.u32 [#allocation6], 4
      %s325 = int_to_ptr.vmem [resolvable:$true] %s324
      %327 = dma.vmem_to_hbm [thread:$0]  %s325, 32, %s5, [#allocation5]
    $region37: #{tpu_custom_call.1} parent=1 // pred_fallthru
      _
    // Predicated region
    $region38: #{tpu_custom_call.1} parent=1 // pred_check
      _
    $region39: #{tpu_custom_call.1} parent=1 // pred_check_branch
      %329 = sbr.rel (0) target = $region41
    $region40: #{tpu_custom_call.1} parent=1 // pred_region
      %330 = dma.done [#allocation5], 32
    $region41: #{tpu_custom_call.1} parent=1 // pred_fallthru
      _
    %331 = vsyncpa [#allocation4], 1
    %332 = vsyncpa [#allocation5], 1

</llo_original>
